<compile_context>
chip_gen: v6e
topology: v6e:2x2x1
jax: 0.10.0
libtpu: 0.0.40
codegen_flags: <defaults>
</compile_context>

<pallas_src>
import functools

import jax
import jax.numpy as jnp
from jax.experimental import pallas as pl
from jax.experimental.pallas import tpu as pltpu

LANE = 128
ROW_UNIT = 16          # blocks are a multiple of 16 rows (keeps native bf16 (16,128) tiles intact)
MIN_BLOCK_ROWS = ROW_UNIT
MAX_BLOCK_ROWS = 16384
TARGET_BLOCKS = 8      # give the "parallel" grid axis work for both TensorCores on v7x
_F32_TEMPS = 6         # conservative count of live f32 block temporaries inside the kernel


def _round_up(v, m):
    return -(-v // m) * m


def _vmem_capacity_bytes():
    """Physical VMEM of the current chip; conservative (v7x-sized) fallback."""
    try:
        info = pltpu.get_tpu_info()
        cap = getattr(info, "vmem_capacity_bytes", None)
        if cap:
            return int(cap)
    except Exception:
        pass
    return 64 << 20


def _pick_block_rows(rows_main, in_bytes_per_elem):
    """Generation- and dtype-aware block sizing + matching VMEM limit."""
    cap = _vmem_capacity_bytes()
    # Per-row VMEM cost: 2 double-buffered native-dtype input streams plus the f32
    # elementwise temporaries Mosaic materializes in VMEM for the block.
    per_row = 2 * 2 * LANE * in_bytes_per_elem + _F32_TEMPS * LANE * 4
    budget = min(cap // 2, 48 << 20)  # never plan for more than half of physical VMEM
    rows = max(MIN_BLOCK_ROWS,
               min(MAX_BLOCK_ROWS, (budget // per_row) // ROW_UNIT * ROW_UNIT))
    # Also cap the block so mid-sized inputs still produce >= TARGET_BLOCKS grid steps
    # (v7x has 2 TCs; a single-block grid would leave one idle).
    rows_for_parallel = max(MIN_BLOCK_ROWS,
                            _round_up(-(-rows_main // TARGET_BLOCKS), ROW_UNIT))
    block_rows = min(rows, rows_for_parallel)
    vmem_limit = min(cap - (4 << 20), max(32 << 20, per_row * block_rows + (8 << 20)))
    return block_rows, int(vmem_limit)


def _focal_kernel(x_ref, t_ref, o_ref, *, alpha, gamma, block_rows,
                  valid_rows_last, mask_last_block):
    x = x_ref[...].astype(jnp.float32)
    t = t_ref[...].astype(jnp.float32)

    # Numerically-stable BCE-with-logits (same formulation torch uses):
    #   bce = max(x, 0) - x*t + log1p(exp(-|x|))
    bce = jnp.maximum(x, 0.0) - x * t + jnp.log1p(jnp.exp(-jnp.abs(x)))
    pt = jnp.exp(-bce)
    one_m_pt = 1.0 - pt
    # TODO(synk): a sigmoid-based pt would cut 3 -> 2 EUP transcendentals (v7x win), but it
    # changes semantics for soft (non-0/1) targets, so the torch-exact form is kept.

    # gamma specialization: small integer gamma (default 2.0) uses VPU multiplies
    # instead of jnp.power (log+exp on the single EUP slot).
    if float(gamma) == float(int(gamma)) and 0 <= int(gamma) <= 4:
        g = int(gamma)
        if g == 0:
            w = jnp.ones_like(one_m_pt)
        else:
            w = one_m_pt
            for _ in range(g - 1):
                w = w * one_m_pt
    else:
        w = jnp.power(one_m_pt, gamma)

    focal = alpha * w * bce

    def write(f):
        # (8,128)-tile-preserving reshape: the reduce is pure VPU vreg adds, one
        # (8,128) partial per grid step -> no cross-step carry -> "parallel" grid.
        o_ref[...] = jnp.sum(f.reshape(block_rows // 8, 8, LANE), axis=0, keepdims=True)

    if mask_last_block:
        # Only the last grid block is partial; the iota/compare/select runs only there
        # (gated by pl.when), keeping VPU work off the other blocks (v7x). The compare is
        # a per-block row index vs. a small constant -> no int32 overflow for huge tensors.
        last = pl.num_programs(0) - 1

        @pl.when(pl.program_id(0) != last)
        def _():
            write(focal)

        @pl.when(pl.program_id(0) == last)
        def _():
            r = jax.lax.broadcasted_iota(jnp.int32, (block_rows, LANE), 0)
            write(jnp.where(r < valid_rows_last, focal, 0.0))
    else:
        write(focal)


def focal_loss(inputs, targets, alpha=0.25, gamma=2.0):
    """Pallas TPU implementation of FocalLoss.forward (returns a scalar)."""
    assert inputs.shape == targets.shape
    n = inputs.size
    if n == 0:
        return jnp.float32(jnp.nan)  # matches torch's mean of an empty tensor

    # Flatten (free reshape), keep native dtype (f32 cast happens in-kernel on the VPU,
    # which also halves HBM read traffic for bf16 inputs).
    x = inputs.reshape(-1)
    t = targets.reshape(-1)

    rows_main = n // LANE            # full 128-lane rows handled by the kernel
    main_elems = rows_main * LANE
    tail_elems = n - main_elems      # < 128 leftover elements (plain jnp below)

    total = jnp.zeros((), jnp.float32)

    if rows_main > 0:
        in_bytes = x.dtype.itemsize + t.dtype.itemsize
        block_rows, vmem_limit = _pick_block_rows(rows_main, in_bytes)
        num_blocks = -(-rows_main // block_rows)
        valid_rows_last = rows_main - (num_blocks - 1) * block_rows
        mask_last = valid_rows_last != block_rows

        # Pad-free: the aligned prefix reshapes in place; only when n is not a multiple of
        # 128 do we take a contiguous prefix slice (no full-tensor jnp.pad copy).
        x_main = x if main_elems == n else x[:main_elems]
        t_main = t if main_elems == n else t[:main_elems]
        x2 = x_main.reshape(rows_main, LANE)
        t2 = t_main.reshape(rows_main, LANE)

        kern = functools.partial(
            _focal_kernel,
            alpha=float(alpha),
            gamma=float(gamma),
            block_rows=block_rows,
            valid_rows_last=valid_rows_last,
            mask_last_block=mask_last,
        )

        partials = pl.pallas_call(
            kern,
            out_shape=jax.ShapeDtypeStruct((num_blocks, 8, LANE), jnp.float32),
            grid_spec=pltpu.PrefetchScalarGridSpec(
                num_scalar_prefetch=0,
                grid=(num_blocks,),
                in_specs=[
                    pl.BlockSpec((block_rows, LANE), lambda i: (i, 0)),
                    pl.BlockSpec((block_rows, LANE), lambda i: (i, 0)),
                ],
                out_specs=pl.BlockSpec((1, 8, LANE), lambda i: (i, 0, 0)),
            ),
            compiler_params=pltpu.CompilerParams(
                dimension_semantics=("parallel",),
                vmem_limit_bytes=vmem_limit,
            ),
        )(x2, t2)
        total = total + jnp.sum(partials)

    if tail_elems:
        # < 128 leftover elements: negligible work, plain jnp in the wrapper.
        xt = x[main_elems:].astype(jnp.float32)
        tt = t[main_elems:].astype(jnp.float32)
        bce = jnp.maximum(xt, 0.0) - xt * tt + jnp.log1p(jnp.exp(-jnp.abs(xt)))
        pt = jnp.exp(-bce)
        total = total + jnp.sum(alpha * (1.0 - pt) ** gamma * bce)

    return total / n


def _focal_loss_ref(inputs, targets, alpha=0.25, gamma=2.0):
    x = inputs.astype(jnp.float32)
    t = targets.astype(jnp.float32)
    bce = jnp.maximum(x, 0.0) - x * t + jnp.log1p(jnp.exp(-jnp.abs(x)))
    pt = jnp.exp(-bce)
    return jnp.mean(alpha * (1.0 - pt) ** gamma * bce)


if __name__ == "__main__":
    key = jax.random.PRNGKey(0)
    k1, k2, k3, k4 = jax.random.split(key, 4)

    # Small shapes consistent with a typical NCHW detection-head output.
    inputs = jax.random.normal(k1, (2, 4, 16, 16), dtype=jnp.float32)
    targets = jax.random.bernoulli(k2, p=0.3, shape=(2, 4, 16, 16)).astype(jnp.float32)

    out = jax.block_until_ready(focal_loss(inputs, targets))
    ref = jax.block_until_ready(_focal_loss_ref(inputs, targets))
    assert jnp.allclose(out, ref, rtol=1e-5, atol=1e-6), (out, ref)

    # Ragged case (exercises the pad-free partial-block + wrapper-tail path).
    inputs_r = jax.random.normal(k3, (2, 3, 5, 7), dtype=jnp.float32)
    targets_r = jax.random.bernoulli(k4, p=0.3, shape=(2, 3, 5, 7)).astype(jnp.float32)
    out_r = jax.block_until_ready(focal_loss(inputs_r, targets_r))
    ref_r = jax.block_until_ready(_focal_loss_ref(inputs_r, targets_r))
    assert jnp.allclose(out_r, ref_r, rtol=1e-5, atol=1e-6), (out_r, ref_r)

    print("KERNEL_OK")
</pallas_src>

<mosaic_0001>
module attributes {stable_mosaic.version = 11 : i64} {
  func.func @_focal_kernel(%arg0: i32, %arg1: memref<16x128xf32, #tpu.memory_space<vmem>>, %arg2: memref<16x128xf32, #tpu.memory_space<vmem>>, %arg3: memref<1x8x128xf32, #tpu.memory_space<vmem>>) attributes {dimension_semantics = [#tpu.dimension_semantics<parallel>], iteration_bounds = array<i64: 1>, scalar_prefetch = 0 : i64, scratch_operands = 0 : i64, tpu.core_type = #tpu.core_type<tc>, window_params = [{transform_indices = @transform_0, window_bounds = array<i64: 16, 128>}, {transform_indices = @transform_1, window_bounds = array<i64: 16, 128>}, {transform_indices = @transform_2, window_bounds = array<i64: 1, 8, 128>}]} {
    %c0 = arith.constant 0 : index
    %c0_0 = arith.constant 0 : index
    %0 = vector.load %arg1[%c0, %c0_0] : memref<16x128xf32, #tpu.memory_space<vmem>>, vector<16x128xf32>
    %c0_1 = arith.constant 0 : index
    %c0_2 = arith.constant 0 : index
    %1 = vector.load %arg2[%c0_1, %c0_2] : memref<16x128xf32, #tpu.memory_space<vmem>>, vector<16x128xf32>
    %cst = arith.constant 0.000000e+00 : f32
    %2 = vector.broadcast %cst : f32 to vector<16x128xf32>
    %3 = arith.maximumf %0, %2 : vector<16x128xf32>
    %4 = arith.mulf %0, %1 : vector<16x128xf32>
    %5 = arith.subf %3, %4 : vector<16x128xf32>
    %6 = math.absf %0 : vector<16x128xf32>
    %cst_3 = arith.constant 0.000000e+00 : f32
    %7 = vector.broadcast %cst_3 : f32 to vector<16x128xf32>
    %8 = arith.subf %7, %6 : vector<16x128xf32>
    %9 = math.exp %8 : vector<16x128xf32>
    %10 = math.log1p %9 : vector<16x128xf32>
    %11 = arith.addf %5, %10 : vector<16x128xf32>
    %cst_4 = arith.constant 0.000000e+00 : f32
    %12 = vector.broadcast %cst_4 : f32 to vector<16x128xf32>
    %13 = arith.subf %12, %11 : vector<16x128xf32>
    %14 = math.exp %13 : vector<16x128xf32>
    %cst_5 = arith.constant 1.000000e+00 : f32
    %15 = vector.broadcast %cst_5 : f32 to vector<16x128xf32>
    %16 = arith.subf %15, %14 : vector<16x128xf32>
    %17 = arith.mulf %16, %16 : vector<16x128xf32>
    %cst_6 = arith.constant 2.500000e-01 : f32
    %18 = vector.broadcast %cst_6 : f32 to vector<16x128xf32>
    %19 = arith.mulf %18, %17 : vector<16x128xf32>
    %20 = arith.mulf %19, %11 : vector<16x128xf32>
    %21 = vector.shape_cast %20 : vector<16x128xf32> to vector<2x8x128xf32>
    %cst_7 = arith.constant dense<0.000000e+00> : vector<8x128xf32>
    %22 = vector.multi_reduction <add>, %21, %cst_7 [0] : vector<2x8x128xf32> to vector<8x128xf32>
    %23 = vector.shape_cast %22 : vector<8x128xf32> to vector<1x8x128xf32>
    %c0_8 = arith.constant 0 : index
    %c0_9 = arith.constant 0 : index
    %c0_10 = arith.constant 0 : index
    %24 = vector.load %arg3[%c0_8, %c0_9, %c0_10] : memref<1x8x128xf32, #tpu.memory_space<vmem>>, vector<1x8x128xf32>
    tpu.vector_store %arg3[%c0_8, %c0_9, %c0_10], %23 {strides = array<i32>} : memref<1x8x128xf32, #tpu.memory_space<vmem>>, vector<1x8x128xf32>,
    return
  }
  func.func @transform_0(%arg0: i32) -> (i32, i32) {
    %c0_i32 = arith.constant 0 : i32
    %c0_i32_0 = arith.constant 0 : i32
    return %arg0, %c0_i32 : i32, i32
  }
  func.func @transform_1(%arg0: i32) -> (i32, i32) {
    %c0_i32 = arith.constant 0 : i32
    %c0_i32_0 = arith.constant 0 : i32
    return %arg0, %c0_i32 : i32, i32
  }
  func.func @transform_2(%arg0: i32) -> (i32, i32, i32) {
    %c0_i32 = arith.constant 0 : i32
    %c0_i32_0 = arith.constant 0 : i32
    %c0_i32_1 = arith.constant 0 : i32
    return %arg0, %c0_i32, %c0_i32_0 : i32, i32, i32
  }
}

</mosaic_0001>

<llo_original>
// kernel: tpu_custom_call.1
$region0: #{tpu_custom_call.1}
  #allocation0 [shape = 'u32[]', space=smem, size = 0x4, offset = 0x4, fixed_abs, tag = 'smem constant byte address 0x4 - core index']
  #allocation1 [shape = 'u32[144,128]{1,0:T(1,128)}', space=vmem, size = 0x12000, scoped, tag = 'internal scratch']
  %s0 = inlined_call_operand.hbm [shape: f32[16,128], index: 0, kind: input, shape index: {}]
  %s1 = inlined_call_operand.hbm [shape: f32[16,128], index: 1, kind: input, shape index: {}]
  %s2 = inlined_call_operand.hbm [shape: f32[1,8,128], index: 2, kind: output, shape index: {}]
  %s3 = sld [smem:[#allocation0]]
  $region26: #{tpu_custom_call.1} parent=0
    _
  %s5 = ssub.s32 1, %s3
  %s6 = scalar_select 0, %s5, %s3
  $region1: #{tpu_custom_call.1} parent=0
    #allocation2 [shape = 'u8[8192]{0}', space=vmem, size = 0x2000, scoped, tag = 'input window, operand 0, single buffered']
    #allocation3 [shape = 's32[1]{0}', space=sflag, size = 0x4, scoped, tag = 'scoped memory for tpu_custom_call.1']
    #allocation4 [shape = 's32[1]{0}', space=sflag, size = 0x4, scoped, tag = 'scoped memory for tpu_custom_call.1']
    #allocation5 [shape = 'u8[8192]{0}', space=vmem, size = 0x2000, scoped, tag = 'input window, operand 1, single buffered']
    #allocation6 [shape = 's32[1]{0}', space=sflag, size = 0x4, scoped, tag = 'scoped memory for tpu_custom_call.1']
    #allocation7 [shape = 'u8[4096]{0}', space=vmem, size = 0x1000, scoped, tag = 'output window, operand 0, single buffered']
    %7 = vsyncpa [#allocation3], 0
    %8 = vsyncpa [#allocation6], 0
    %9 = vsyncpa [#allocation4], 0
    // Predicated region
    $region2: #{tpu_custom_call.1} parent=1 // pred_check
      _
    $region3: #{tpu_custom_call.1} parent=1 // pred_check_branch
      %11 = sbr.rel (0) target = $region5
    $region4: #{tpu_custom_call.1} parent=1 // pred_region
      %s13 = ssub.s32 256, 256
      %14 = vsyncadd [#allocation3], %s13
      %s15 = sshll.u32 [#allocation2], 4
      %s16 = int_to_ptr.vmem [resolvable:$true] %s15
      %21 = dma.hbm_to_vmem [thread:$0]  %s0, 256, %s16, [#allocation3], 128, 128, 8
    $region5: #{tpu_custom_call.1} parent=1 // pred_fallthru
      _
    // Predicated region
    $region6: #{tpu_custom_call.1} parent=1 // pred_check
      _
    $region7: #{tpu_custom_call.1} parent=1 // pred_check_branch
      %23 = sbr.rel (0) target = $region9
    $region8: #{tpu_custom_call.1} parent=1 // pred_region
      %s25 = ssub.s32 256, 256
      %26 = vsyncadd [#allocation6], %s25
      %s27 = sshll.u32 [#allocation5], 4
      %s28 = int_to_ptr.vmem [resolvable:$true] %s27
      %33 = dma.hbm_to_vmem [thread:$0]  %s1, 256, %s28, [#allocation6], 128, 128, 8
    $region9: #{tpu_custom_call.1} parent=1 // pred_fallthru
      _
    // Predicated region
    $region10: #{tpu_custom_call.1} parent=1 // pred_check
      _
    $region11: #{tpu_custom_call.1} parent=1 // pred_check_branch
      %35 = sbr.rel (0) target = $region13
    $region12: #{tpu_custom_call.1} parent=1 // pred_region
      %36 = dma.done [#allocation3], 256
    $region13: #{tpu_custom_call.1} parent=1 // pred_fallthru
      _
    // Predicated region
    $region14: #{tpu_custom_call.1} parent=1 // pred_check
      _
    $region15: #{tpu_custom_call.1} parent=1 // pred_check_branch
      %38 = sbr.rel (0) target = $region17
    $region16: #{tpu_custom_call.1} parent=1 // pred_region
      %39 = dma.done [#allocation6], 256
    $region17: #{tpu_custom_call.1} parent=1 // pred_fallthru
      _
    %v40 = vld [vmem:[#allocation2] sm:$0xff]
    %v41 = vld [vmem:[#allocation2 + $0x8] sm:$0xff]
    %v42 = vld [vmem:[#allocation5] sm:$0xff]
    %v43 = vld [vmem:[#allocation5 + $0x8] sm:$0xff]
    %v44 = vmax.f32 %v40, 0.0
    %v45 = vmax.f32 %v41, 0.0
    %v46 = vmul.f32 %v40, %v42
    %v47 = vmul.f32 %v41, %v43
    %v48 = vsub.f32 %v44, %v46
    %v49 = vsub.f32 %v45, %v47
    %v50 = vand.u32 2147483647, %v40
    %v51 = vand.u32 2147483647, %v41
    %v52 = vsub.f32 0.0, %v50
    %v53 = vsub.f32 0.0, %v51
    %v54 = vmul.f32 %v52, 1.442695
    %v55 = vpow.pop %v54
    %v56 = vmul.f32 %v53, 1.442695
    %v57 = vpow.pop %v56
    %v58 = vadd.f32 %v55, 1.0
    %v59 = vlog2.pop %v58
    %v60 = vmul.f32 %v59, 0.6931472
    %v61 = vmul.f32 -0.5, %v55
    %v62 = vadd.f32 %v61, 1.0
    %v63 = vmul.f32 %v62, %v55
    %v64 = vand.u32 2147483647, %v55
    %vm65 = vcmp.lt.f32.partialorder %v64, 0.0004427343
    %v66 = vsel %vm65, %v63, %v60
    %v67 = vadd.f32 %v57, 1.0
    %v68 = vlog2.pop %v67
    %v69 = vmul.f32 %v68, 0.6931472
    %v70 = vmul.f32 -0.5, %v57
    %v71 = vadd.f32 %v70, 1.0
    %v72 = vmul.f32 %v71, %v57
    %v73 = vand.u32 2147483647, %v57
    %vm74 = vcmp.lt.f32.partialorder %v73, 0.0004427343
    %v75 = vsel %vm74, %v72, %v69
    %v76 = vadd.f32 %v48, %v66
    %v77 = vadd.f32 %v49, %v75
    %v78 = vsub.f32 0.0, %v76
    %v79 = vsub.f32 0.0, %v77
    %v80 = vmul.f32 %v78, 1.442695
    %v81 = vpow.pop %v80
    %v82 = vmul.f32 %v79, 1.442695
    %v83 = vpow.pop %v82
    %v84 = vsub.f32 1.0, %v81
    %v85 = vsub.f32 1.0, %v83
    %v86 = vmul.f32 %v84, %v84
    %v87 = vmul.f32 %v85, %v85
    %v88 = vmul.f32 %v86, 0.25
    %v89 = vmul.f32 %v87, 0.25
    %v90 = vmul.f32 %v88, %v76
    %v91 = vmul.f32 %v89, %v77
    %v92 = vadd.f32 %v90, %v91
    %93 = vst [vmem:[#allocation7] sm:$0xff] %v92
    // Predicated region
    $region18: #{tpu_custom_call.1} parent=1 // pred_check
      _
    $region19: #{tpu_custom_call.1} parent=1 // pred_check_branch
      %95 = sbr.rel (0) target = $region21
    $region20: #{tpu_custom_call.1} parent=1 // pred_region
      %s97 = ssub.s32 128, 128
      %98 = vsyncadd [#allocation4], %s97
      %s100 = sshll.u32 [#allocation7], 4
      %s101 = int_to_ptr.vmem [resolvable:$true] %s100
      %103 = dma.vmem_to_hbm [thread:$0]  %s101, 128, %s2, [#allocation4]
    $region21: #{tpu_custom_call.1} parent=1 // pred_fallthru
      _
    // Predicated region
    $region22: #{tpu_custom_call.1} parent=1 // pred_check
      _
    $region23: #{tpu_custom_call.1} parent=1 // pred_check_branch
      %105 = sbr.rel (0) target = $region25
    $region24: #{tpu_custom_call.1} parent=1 // pred_region
      %106 = dma.done [#allocation4], 128
    $region25: #{tpu_custom_call.1} parent=1 // pred_fallthru
      _
    %107 = vsyncpa [#allocation3], 1
    %108 = vsyncpa [#allocation6], 1
    %109 = vsyncpa [#allocation4], 1

</llo_original>
